<compile_context>
chip_gen: v7x
topology: tpu7x:2x2x1
jax: 0.10.0
libtpu: 0.0.40
codegen_flags: <defaults>
</compile_context>

<pallas_src>
import jax
import jax.numpy as jnp
from jax.experimental import pallas as pl
from jax.experimental.pallas import tpu as pltpu


_DEFAULT_TILE_B = 4096   # x tile at D=32 bf16 = 256 KiB; 2x buffered + weights << 32 MiB


def _round_up(x, m):
    return ((x + m - 1) // m) * m


def _regressor_kernel(x_ref, w1_ref, b1_ref, w2_ref, b2_ref, w3_ref, b3_ref,
                      out_ref):
    """One batch tile of fc3(relu(fc2(relu(fc1(x)))))."""
    x = x_ref[...]                                                    # (TB, D) bf16

    # fc1 + ReLU: bf16 MXU operands, f32 accumulate, f32 elementwise.
    h1 = jnp.dot(x, w1_ref[...], preferred_element_type=jnp.float32)
    h1 = jnp.maximum(h1 + b1_ref[...], 0.0)

    # fc2 + ReLU (cast only the MXU operand to bf16; keep elementwise in f32).
    h2 = jnp.dot(h1.astype(jnp.bfloat16), w2_ref[...],
                 preferred_element_type=jnp.float32)
    h2 = jnp.maximum(h2 + b2_ref[...], 0.0)

    # fc3
    h3 = jnp.dot(h2.astype(jnp.bfloat16), w3_ref[...],
                 preferred_element_type=jnp.float32)
    # (TB, 1) store is lane-sparse; accepted knowingly (kernel is HBM/DMA bound).
    out_ref[...] = (h3 + b3_ref[...]).astype(out_ref.dtype)


def regressor_forward(x, params, *, tile_b=_DEFAULT_TILE_B):
    """x: [B, T, D] float32. Returns [B, 1] float32."""
    # Glue: last-timestep slice + bf16 narrowing (halves the kernel's input
    # HBM bytes). For large D, fold this slice into the x BlockSpec
    # ((TILE_B, 1, D) block, index_map (i, T-1, 0)) to skip the extra HBM pass.
    x_last = x[:, -1, :].astype(jnp.bfloat16)
    B, D = x_last.shape

    tb = min(tile_b, _round_up(B, 8))          # keep sublane dim a multiple of 8
    b_pad = _round_up(B, tb)
    if b_pad != B:                             # ragged-tail handling: pad batch
        x_last = jnp.pad(x_last, ((0, b_pad - B), (0, 0)))

    def resident(shape):
        # Constant block index -> DMA'd once, stays VMEM-resident across tiles.
        return pl.BlockSpec(shape, lambda i: (0,) * len(shape))

    grid_spec = pltpu.PrefetchScalarGridSpec(
        num_scalar_prefetch=0,
        grid=(b_pad // tb,),
        in_specs=[
            pl.BlockSpec((tb, D), lambda i: (i, 0)),   # streamed, double-buffered
            resident(params["w1"].shape), resident(params["b1"].shape),
            resident(params["w2"].shape), resident(params["b2"].shape),
            resident(params["w3"].shape), resident(params["b3"].shape),
        ],
        out_specs=pl.BlockSpec((tb, 1), lambda i: (i, 0)),
    )

    out = pl.pallas_call(
        _regressor_kernel,
        out_shape=jax.ShapeDtypeStruct((b_pad, 1), jnp.float32),
        grid_spec=grid_spec,
        compiler_params=pltpu.CompilerParams(
            dimension_semantics=("parallel",),     # megacore sharding on v7x
            vmem_limit_bytes=32 * 1024 * 1024,     # explicit; safe on v7x VMEM
        ),
    )(x_last,
      params["w1"], params["b1"],
      params["w2"], params["b2"],
      params["w3"], params["b3"])

    return out[:B] if b_pad != B else out


def init_params(key, input_size):
    """nn.Linear-style init; weights stored transposed [in,out] in bf16, biases f32."""
    k1, k2, k3, k4, k5, k6 = jax.random.split(key, 6)

    def linear(kw, kb, fan_in, fan_out):
        bound = 1.0 / jnp.sqrt(jnp.float32(fan_in))   # PyTorch default U(-1/sqrt(fan_in), .)
        w = jax.random.uniform(kw, (fan_in, fan_out), jnp.float32, -bound, bound)
        b = jax.random.uniform(kb, (1, fan_out), jnp.float32, -bound, bound)
        return w.astype(jnp.bfloat16), b

    w1, b1 = linear(k1, k2, input_size, 64)
    w2, b2 = linear(k3, k4, 64, 16)
    w3, b3 = linear(k5, k6, 16, 1)
    return {"w1": w1, "b1": b1, "w2": w2, "b2": b2, "w3": w3, "b3": b3}


def regressor_reference_matched(x, params):
    """Pure-JAX reference with the same bf16-operand / f32-accumulate recipe."""
    h = x[:, -1, :].astype(jnp.bfloat16)
    h = jnp.maximum(
        jnp.dot(h, params["w1"], preferred_element_type=jnp.float32) + params["b1"], 0.0)
    h = jnp.maximum(
        jnp.dot(h.astype(jnp.bfloat16), params["w2"],
                preferred_element_type=jnp.float32) + params["b2"], 0.0)
    return jnp.dot(h.astype(jnp.bfloat16), params["w3"],
                   preferred_element_type=jnp.float32) + params["b3"]


def regressor_reference_f32(x, params):
    """Full-f32 reference (matches the PyTorch module's math up to bf16 error)."""
    h = x[:, -1, :]
    h = jnp.maximum(h @ params["w1"].astype(jnp.float32) + params["b1"], 0.0)
    h = jnp.maximum(h @ params["w2"].astype(jnp.float32) + params["b2"], 0.0)
    return h @ params["w3"].astype(jnp.float32) + params["b3"]


if __name__ == "__main__":
    B, T, D = 20, 6, 32                                # batch, seq, input_size
    key = jax.random.PRNGKey(0)
    kx, kp = jax.random.split(key)

    x = jax.random.normal(kx, (B, T, D), dtype=jnp.float32)
    params = init_params(kp, D)

    # Default path (single batch tile at this small B).
    out = jax.block_until_ready(regressor_forward(x, params))
    # Small-tile path: exercises the batch grid + ragged-tail padding (grid=3).
    out_tiled = jax.block_until_ready(regressor_forward(x, params, tile_b=8))

    ref_m = regressor_reference_matched(x, params)
    ref_f = regressor_reference_f32(x, params)

    assert out.shape == (B, 1), out.shape
    assert out_tiled.shape == (B, 1), out_tiled.shape
    assert jnp.allclose(out, ref_m, atol=1e-3, rtol=1e-3), \
        float(jnp.max(jnp.abs(out - ref_m)))
    assert jnp.allclose(out_tiled, ref_m, atol=1e-3, rtol=1e-3), \
        float(jnp.max(jnp.abs(out_tiled - ref_m)))
    assert jnp.allclose(out, ref_f, atol=5e-2, rtol=5e-2), \
        float(jnp.max(jnp.abs(out - ref_f)))

    print("KERNEL_OK")
</pallas_src>

<mosaic_0001>
module attributes {stable_mosaic.version = 11 : i64} {
  func.func @_regressor_kernel(%arg0: i32, %arg1: memref<24x32xbf16, #tpu.memory_space<vmem>>, %arg2: memref<32x64xbf16, #tpu.memory_space<vmem>>, %arg3: memref<1x64xf32, #tpu.memory_space<vmem>>, %arg4: memref<64x16xbf16, #tpu.memory_space<vmem>>, %arg5: memref<1x16xf32, #tpu.memory_space<vmem>>, %arg6: memref<16x1xbf16, #tpu.memory_space<vmem>>, %arg7: memref<1x1xf32, #tpu.memory_space<vmem>>, %arg8: memref<24x1xf32, #tpu.memory_space<vmem>>) attributes {dimension_semantics = [#tpu.dimension_semantics<parallel>], iteration_bounds = array<i64: 1>, scalar_prefetch = 0 : i64, scratch_operands = 0 : i64, tpu.core_type = #tpu.core_type<tc>, window_params = [{transform_indices = @transform_0, window_bounds = array<i64: 24, 32>}, {pipeline_mode = #tpu.pipeline_mode<synchronous>, transform_indices = @transform_1, window_bounds = array<i64: 32, 64>}, {pipeline_mode = #tpu.pipeline_mode<synchronous>, transform_indices = @transform_2, window_bounds = array<i64: 1, 64>}, {pipeline_mode = #tpu.pipeline_mode<synchronous>, transform_indices = @transform_3, window_bounds = array<i64: 64, 16>}, {pipeline_mode = #tpu.pipeline_mode<synchronous>, transform_indices = @transform_4, window_bounds = array<i64: 1, 16>}, {pipeline_mode = #tpu.pipeline_mode<synchronous>, transform_indices = @transform_5, window_bounds = array<i64: 16, 1>}, {pipeline_mode = #tpu.pipeline_mode<synchronous>, transform_indices = @transform_6, window_bounds = array<i64: 1, 1>}, {transform_indices = @transform_7, window_bounds = array<i64: 24, 1>}]} {
    %c0 = arith.constant 0 : index
    %c0_0 = arith.constant 0 : index
    %0 = vector.load %arg1[%c0, %c0_0] : memref<24x32xbf16, #tpu.memory_space<vmem>>, vector<24x32xbf16>
    %c0_1 = arith.constant 0 : index
    %c0_2 = arith.constant 0 : index
    %1 = vector.load %arg2[%c0_1, %c0_2] : memref<32x64xbf16, #tpu.memory_space<vmem>>, vector<32x64xbf16>
    %cst = arith.constant dense<0.000000e+00> : vector<24x64xf32>
    %2 = tpu.matmul %0, %1, %cst {dimension_numbers = #tpu.dot_dimension_numbers<[1], [0], [0], [1], [0, 0, 1, 1], [], []>} : vector<24x32xbf16>, vector<32x64xbf16>, vector<24x64xf32> -> vector<24x64xf32>
    %c0_3 = arith.constant 0 : index
    %c0_4 = arith.constant 0 : index
    %3 = vector.load %arg3[%c0_3, %c0_4] : memref<1x64xf32, #tpu.memory_space<vmem>>, vector<1x64xf32>
    %4 = vector.broadcast %3 : vector<1x64xf32> to vector<24x64xf32>
    %5 = arith.addf %2, %4 : vector<24x64xf32>
    %cst_5 = arith.constant 0.000000e+00 : f32
    %6 = vector.broadcast %cst_5 : f32 to vector<24x64xf32>
    %7 = arith.maximumf %5, %6 : vector<24x64xf32>
    %8 = arith.truncf %7 : vector<24x64xf32> to vector<24x64xbf16>
    %c0_6 = arith.constant 0 : index
    %c0_7 = arith.constant 0 : index
    %9 = vector.load %arg4[%c0_6, %c0_7] : memref<64x16xbf16, #tpu.memory_space<vmem>>, vector<64x16xbf16>
    %cst_8 = arith.constant dense<0.000000e+00> : vector<24x16xf32>
    %10 = tpu.matmul %8, %9, %cst_8 {dimension_numbers = #tpu.dot_dimension_numbers<[1], [0], [0], [1], [0, 0, 1, 1], [], []>} : vector<24x64xbf16>, vector<64x16xbf16>, vector<24x16xf32> -> vector<24x16xf32>
    %c0_9 = arith.constant 0 : index
    %c0_10 = arith.constant 0 : index
    %11 = vector.load %arg5[%c0_9, %c0_10] : memref<1x16xf32, #tpu.memory_space<vmem>>, vector<1x16xf32>
    %12 = vector.broadcast %11 : vector<1x16xf32> to vector<24x16xf32>
    %13 = arith.addf %10, %12 : vector<24x16xf32>
    %cst_11 = arith.constant 0.000000e+00 : f32
    %14 = vector.broadcast %cst_11 : f32 to vector<24x16xf32>
    %15 = arith.maximumf %13, %14 : vector<24x16xf32>
    %16 = arith.truncf %15 : vector<24x16xf32> to vector<24x16xbf16>
    %c0_12 = arith.constant 0 : index
    %c0_13 = arith.constant 0 : index
    %17 = vector.load %arg6[%c0_12, %c0_13] : memref<16x1xbf16, #tpu.memory_space<vmem>>, vector<16x1xbf16>
    %cst_14 = arith.constant dense<0.000000e+00> : vector<24x1xf32>
    %18 = tpu.matmul %16, %17, %cst_14 {dimension_numbers = #tpu.dot_dimension_numbers<[1], [0], [0], [1], [0, 0, 1, 1], [], []>} : vector<24x16xbf16>, vector<16x1xbf16>, vector<24x1xf32> -> vector<24x1xf32>
    %c0_15 = arith.constant 0 : index
    %c0_16 = arith.constant 0 : index
    %19 = vector.load %arg7[%c0_15, %c0_16] : memref<1x1xf32, #tpu.memory_space<vmem>>, vector<1x1xf32>
    %20 = vector.broadcast %19 : vector<1x1xf32> to vector<24x1xf32>
    %21 = arith.addf %18, %20 : vector<24x1xf32>
    %c0_17 = arith.constant 0 : index
    %c0_18 = arith.constant 0 : index
    %22 = vector.load %arg8[%c0_17, %c0_18] : memref<24x1xf32, #tpu.memory_space<vmem>>, vector<24x1xf32>
    tpu.vector_store %arg8[%c0_17, %c0_18], %21 {strides = array<i32>} : memref<24x1xf32, #tpu.memory_space<vmem>>, vector<24x1xf32>,
    return
  }
  func.func @transform_0(%arg0: i32) -> (i32, i32) {
    %c0_i32 = arith.constant 0 : i32
    %c0_i32_0 = arith.constant 0 : i32
    return %arg0, %c0_i32 : i32, i32
  }
  func.func @transform_1(%arg0: i32) -> (i32, i32) {
    %c0_i32 = arith.constant 0 : i32
    %c0_i32_0 = arith.constant 0 : i32
    %c0_i32_1 = arith.constant 0 : i32
    return %c0_i32, %c0_i32_0 : i32, i32
  }
  func.func @transform_2(%arg0: i32) -> (i32, i32) {
    %c0_i32 = arith.constant 0 : i32
    %c0_i32_0 = arith.constant 0 : i32
    %c0_i32_1 = arith.constant 0 : i32
    return %c0_i32, %c0_i32_0 : i32, i32
  }
  func.func @transform_3(%arg0: i32) -> (i32, i32) {
    %c0_i32 = arith.constant 0 : i32
    %c0_i32_0 = arith.constant 0 : i32
    %c0_i32_1 = arith.constant 0 : i32
    return %c0_i32, %c0_i32_0 : i32, i32
  }
  func.func @transform_4(%arg0: i32) -> (i32, i32) {
    %c0_i32 = arith.constant 0 : i32
    %c0_i32_0 = arith.constant 0 : i32
    %c0_i32_1 = arith.constant 0 : i32
    return %c0_i32, %c0_i32_0 : i32, i32
  }
  func.func @transform_5(%arg0: i32) -> (i32, i32) {
    %c0_i32 = arith.constant 0 : i32
    %c0_i32_0 = arith.constant 0 : i32
    %c0_i32_1 = arith.constant 0 : i32
    return %c0_i32, %c0_i32_0 : i32, i32
  }
  func.func @transform_6(%arg0: i32) -> (i32, i32) {
    %c0_i32 = arith.constant 0 : i32
    %c0_i32_0 = arith.constant 0 : i32
    %c0_i32_1 = arith.constant 0 : i32
    return %c0_i32, %c0_i32_0 : i32, i32
  }
  func.func @transform_7(%arg0: i32) -> (i32, i32) {
    %c0_i32 = arith.constant 0 : i32
    %c0_i32_0 = arith.constant 0 : i32
    return %arg0, %c0_i32 : i32, i32
  }
}

</mosaic_0001>

<llo_original>
// kernel: tpu_custom_call.1
$region0: #{tpu_custom_call.1}
  #allocation0 [shape = 'u32[]', space=smem, size = 0x4, offset = 0x4, fixed_abs, tag = 'smem constant byte address 0x4 - core index']
  #allocation1 [shape = 'u32[144,128]{1,0:T(1,128)}', space=vmem, size = 0x12000, scoped, tag = 'internal scratch']
  #allocation2 [shape = 'f32[1,1]{1,0:T(1,128)S(1)}', space=vmem, size = 0x200, scoped, tag = 'scoped memory for tpu_custom_call.1']
  %s0 = inlined_call_operand.vmem [shape: bf16[24,32], index: 0, kind: input, shape index: {}]
  %s1 = inlined_call_operand.vmem [shape: bf16[32,64], index: 1, kind: input, shape index: {}]
  %s2 = inlined_call_operand.vmem [shape: f32[1,64], index: 2, kind: input, shape index: {}]
  %s3 = inlined_call_operand.vmem [shape: bf16[64,16], index: 3, kind: input, shape index: {}]
  %s4 = inlined_call_operand.vmem [shape: f32[1,16], index: 4, kind: input, shape index: {}]
  %s5 = inlined_call_operand.vmem [shape: bf16[16,1], index: 5, kind: input, shape index: {}]
  %s6 = inlined_call_operand.<no memory space> [shape: f32[1,1], index: 6, kind: input, shape index: {}]
  %s7 = inlined_call_operand.vmem [shape: f32[24,1], index: 7, kind: output, shape index: {}]
  %s8 = sld [smem:[#allocation0]]
  $region38: #{tpu_custom_call.1} parent=0
    _
  %s10 = ssub.s32 1, %s8
  %s11 = scalar_select 0, %s10, %s8
  %v12 = vstv %s6
  %13 = vst [vmem:[#allocation2] sm:$0x1] %v12
  // Predicated region
  $region2: #{tpu_custom_call.1} parent=0 // pred_check
    _
  $region3: #{tpu_custom_call.1} parent=0 // pred_check_branch
    %15 = sbr.rel (0) target = $region5
  $region4: #{tpu_custom_call.1} parent=0 // pred_region
    _
  $region5: #{tpu_custom_call.1} parent=0 // pred_fallthru
    _
  // Predicated region
  $region6: #{tpu_custom_call.1} parent=0 // pred_check
    _
  $region7: #{tpu_custom_call.1} parent=0 // pred_check_branch
    %17 = sbr.rel (0) target = $region9
  $region8: #{tpu_custom_call.1} parent=0 // pred_region
    _
  $region9: #{tpu_custom_call.1} parent=0 // pred_fallthru
    _
  // Predicated region
  $region10: #{tpu_custom_call.1} parent=0 // pred_check
    _
  $region11: #{tpu_custom_call.1} parent=0 // pred_check_branch
    %19 = sbr.rel (0) target = $region13
  $region12: #{tpu_custom_call.1} parent=0 // pred_region
    _
  $region13: #{tpu_custom_call.1} parent=0 // pred_fallthru
    _
  // Predicated region
  $region14: #{tpu_custom_call.1} parent=0 // pred_check
    _
  $region15: #{tpu_custom_call.1} parent=0 // pred_check_branch
    %21 = sbr.rel (0) target = $region17
  $region16: #{tpu_custom_call.1} parent=0 // pred_region
    _
  $region17: #{tpu_custom_call.1} parent=0 // pred_fallthru
    _
  // Predicated region
  $region18: #{tpu_custom_call.1} parent=0 // pred_check
    _
  $region19: #{tpu_custom_call.1} parent=0 // pred_check_branch
    %23 = sbr.rel (0) target = $region21
  $region20: #{tpu_custom_call.1} parent=0 // pred_region
    _
  $region21: #{tpu_custom_call.1} parent=0 // pred_fallthru
    _
  // Predicated region
  $region22: #{tpu_custom_call.1} parent=0 // pred_check
    _
  $region23: #{tpu_custom_call.1} parent=0 // pred_check_branch
    %25 = sbr.rel (0) target = $region25
  $region24: #{tpu_custom_call.1} parent=0 // pred_region
    _
  $region25: #{tpu_custom_call.1} parent=0 // pred_fallthru
    _
  // Predicated region
  $region26: #{tpu_custom_call.1} parent=0 // pred_check
    _
  $region27: #{tpu_custom_call.1} parent=0 // pred_check_branch
    %27 = sbr.rel (0) target = $region29
  $region28: #{tpu_custom_call.1} parent=0 // pred_region
    _
  $region29: #{tpu_custom_call.1} parent=0 // pred_fallthru
    _
  %v29 = vld [vmem:[%s0] sm:$0xf]
  %v30 = vld [vmem:[%s0 + $0x4] sm:$0xf]
  %v31 = vld [vmem:[%s0 + $0x8] sm:$0xf]
  %v32 = vld [vmem:[%s1] sm:$0xf]
  %v33 = vld [vmem:[%s1 + $0x4] sm:$0xf]
  %v34 = vld [vmem:[%s1 + $0x8] sm:$0xf]
  %v35 = vld [vmem:[%s1 + $0xc] sm:$0xf]
  %v36 = vld [vmem:[%s2] sm:$0x1]
  %v38 = vlaneseq
  %v39 = vshrl.u32 %v38, 7
  %v40 = vsub.s32 0, %v39
  %v41 = vrot.slane %v36, %v40
  %v46 = vunpack.c.l.b16 %v29
  %v47 = vunpack.c.l.b16 %v30
  %v48 = vunpack.c.l.b16 %v31
  %v49 = vpack.c.b16 %v47, %v46
  %v50 = vpack.c.b16 %v48, %v48
  %v55 = vunpack.c.l.b16 %v32
  %v56 = vunpack.c.l.b16 %v33
  %v57 = vunpack.c.l.b16 %v34
  %v58 = vunpack.c.l.b16 %v35
  %v59 = vpack.c.b16 %v56, %v55
  %v60 = vpack.c.b16 %v58, %v57
  %vm63 = vcmask 261120
  %v65 = vsel %vm63, %v49, 0
  %v68 = vsel %vm63, %v50, 0
  %70 = vmatprep.subr.bf16.mxu0 0
  %71 = vmatpush1.bf16.msra.mxu0 %v59
  %72 = vmatprep.subr.bf16.mxu0 0
  %73 = vmatpush1.bf16.msra.mxu0 %v60
  %74 = vmatprep.subr.bf16.mxu0 0
  %75 = vmatpush1.bf16.msra.mxu0 0
  %76 = vmatprep.subr.bf16.mxu0 0
  %77 = vmatpush1.bf16.msra.mxu0 0
  %78 = vmatprep.subr.bf16.mxu0 0
  %79 = vmatpush1.bf16.msra.mxu0 0
  %80 = vmatprep.subr.bf16.mxu0 0
  %81 = vmatpush1.bf16.msra.mxu0 0
  %82 = vmatprep.subr.bf16.mxu0 0
  %83 = vmatpush1.bf16.msra.mxu0 0
  %84 = vmatprep.subr.bf16.mxu0 0
  %85 = vmatpush1.bf16.msra.mxu0 0
  %86 = vmatprep.subr.bf16.mxu0 0
  %87 = vmatpush1.bf16.msra.mxu0 0
  %88 = vmatprep.subr.bf16.mxu0 0
  %89 = vmatpush1.bf16.msra.mxu0 0
  %90 = vmatprep.subr.bf16.mxu0 0
  %91 = vmatpush1.bf16.msra.mxu0 0
  %92 = vmatprep.subr.bf16.mxu0 0
  %93 = vmatpush1.bf16.msra.mxu0 0
  %94 = vmatprep.subr.bf16.mxu0 0
  %95 = vmatpush1.bf16.msra.mxu0 0
  %96 = vmatprep.subr.bf16.mxu0 0
  %97 = vmatpush1.bf16.msra.mxu0 0
  %98 = vmatprep.subr.bf16.mxu0 0
  %99 = vmatpush1.bf16.msra.mxu0 0
  %100 = vmatprep.subr.bf16.mxu0 0
  %101 = vmatpush1.bf16.msra.mxu0 0
  %102 = vmatprep.mubr.bf16.mxu0 0
  %103 = vmatmul.mubr.bf16.gmra.mrb[0].mxu0 %v65
  %v104 = vpop.f32.mrb[0].mxu0
  %v105 = vadd.f32 %v41, %v104
  %v106 = vpop.f32.mrb[0].mxu0
  %v107 = vpop.f32.mrb[0].mxu0
  %v108 = vadd.f32 %v41, %v107
  %v109 = vpop.f32.mrb[0].mxu0
  %110 = vmatprep.mubr.bf16.mxu0 0
  %111 = vmatmul.mubr.bf16.gmra.mrb[0].mxu0 %v68
  %v112 = vpop.f32.mrb[0].mxu0
  %v113 = vadd.f32 %v41, %v112
  %v114 = vpop.f32.mrb[0].mxu0
  %v115 = vpop.f32.mrb[0].mxu0
  %v116 = vpop.f32.mrb[0].mxu0
  %117 = vdwg.mxu0
  %v118 = vmax.f32 %v105, 0.0
  %v119 = vmax.f32 %v108, 0.0
  %v120 = vmax.f32 %v113, 0.0
  %v121 = vpack.c.bf16 %v119, %v118
  %v122 = vpack.c.bf16 %v120, %v120
  %v123 = vld [vmem:[%s3] sm:$0xf]
  %v124 = vld [vmem:[%s3 + $0x4] sm:$0xf]
  %v125 = vld [vmem:[%s3 + $0x8] sm:$0xf]
  %v126 = vld [vmem:[%s3 + $0xc] sm:$0xf]
  %v127 = vld [vmem:[%s3 + $0x10] sm:$0xf]
  %v128 = vld [vmem:[%s3 + $0x14] sm:$0xf]
  %v129 = vld [vmem:[%s3 + $0x18] sm:$0xf]
  %v130 = vld [vmem:[%s3 + $0x1c] sm:$0xf]
  %v131 = vld [vmem:[%s4] sm:$0x1]
  %v133 = vlaneseq
  %v134 = vshrl.u32 %v133, 7
  %v135 = vsub.s32 0, %v134
  %v136 = vrot.slane %v131, %v135
  %v146 = vunpack.c.l.b16 %v123
  %v147 = vunpack.c.l.b16 %v124
  %v148 = vunpack.c.l.b16 %v125
  %v149 = vunpack.c.l.b16 %v126
  %v150 = vunpack.c.l.b16 %v127
  %v151 = vunpack.c.l.b16 %v128
  %v152 = vunpack.c.l.b16 %v129
  %v153 = vunpack.c.l.b16 %v130
  %v154 = vpack.c.b16 %v147, %v146
  %v155 = vpack.c.b16 %v149, %v148
  %v156 = vpack.c.b16 %v151, %v150
  %v157 = vpack.c.b16 %v153, %v152
  %vm162 = vcmask 523264
  %v164 = vsel %vm162, %v121, 0
  %v167 = vsel %vm162, %v122, 0
  %169 = vmatprep.subr.bf16.mxu0 0
  %170 = vmatpush1.bf16.msra.mxu0 %v154
  %171 = vmatprep.subr.bf16.mxu0 0
  %172 = vmatpush1.bf16.msra.mxu0 %v155
  %173 = vmatprep.subr.bf16.mxu0 0
  %174 = vmatpush1.bf16.msra.mxu0 %v156
  %175 = vmatprep.subr.bf16.mxu0 0
  %176 = vmatpush1.bf16.msra.mxu0 %v157
  %177 = vmatprep.subr.bf16.mxu0 0
  %178 = vmatpush1.bf16.msra.mxu0 0
  %179 = vmatprep.subr.bf16.mxu0 0
  %180 = vmatpush1.bf16.msra.mxu0 0
  %181 = vmatprep.subr.bf16.mxu0 0
  %182 = vmatpush1.bf16.msra.mxu0 0
  %183 = vmatprep.subr.bf16.mxu0 0
  %184 = vmatpush1.bf16.msra.mxu0 0
  %185 = vmatprep.subr.bf16.mxu0 0
  %186 = vmatpush1.bf16.msra.mxu0 0
  %187 = vmatprep.subr.bf16.mxu0 0
  %188 = vmatpush1.bf16.msra.mxu0 0
  %189 = vmatprep.subr.bf16.mxu0 0
  %190 = vmatpush1.bf16.msra.mxu0 0
  %191 = vmatprep.subr.bf16.mxu0 0
  %192 = vmatpush1.bf16.msra.mxu0 0
  %193 = vmatprep.subr.bf16.mxu0 0
  %194 = vmatpush1.bf16.msra.mxu0 0
  %195 = vmatprep.subr.bf16.mxu0 0
  %196 = vmatpush1.bf16.msra.mxu0 0
  %197 = vmatprep.subr.bf16.mxu0 0
  %198 = vmatpush1.bf16.msra.mxu0 0
  %199 = vmatprep.subr.bf16.mxu0 0
  %200 = vmatpush1.bf16.msra.mxu0 0
  %201 = vmatprep.mubr.bf16.mxu0 0
  %202 = vmatmul.mubr.bf16.gmra.mrb[0].mxu0 %v164
  %v203 = vpop.f32.mrb[0].mxu0
  %v204 = vadd.f32 %v136, %v203
  %v205 = vpop.f32.mrb[0].mxu0
  %v206 = vpop.f32.mrb[0].mxu0
  %v207 = vadd.f32 %v136, %v206
  %v208 = vpop.f32.mrb[0].mxu0
  %209 = vmatprep.mubr.bf16.mxu0 0
  %210 = vmatmul.mubr.bf16.gmra.mrb[0].mxu0 %v167
  %v211 = vpop.f32.mrb[0].mxu0
  %v212 = vadd.f32 %v136, %v211
  %v213 = vpop.f32.mrb[0].mxu0
  %v214 = vpop.f32.mrb[0].mxu0
  %v215 = vpop.f32.mrb[0].mxu0
  %216 = vdwg.mxu0
  %v217 = vmax.f32 %v204, 0.0
  %v218 = vmax.f32 %v207, 0.0
  %v219 = vmax.f32 %v212, 0.0
  %v220 = vpack.c.bf16 %v218, %v217
  %v221 = vpack.c.bf16 %v219, %v219
  %v222 = vld [vmem:[%s5] sm:$0xf]
  %v223 = vld [vmem:[%s5 + $0x4] sm:$0xf]
  %v224 = vld [vmem:[#allocation2] sm:$0x1]
  %v226 = vlaneseq
  %v227 = vshrl.u32 %v226, 7
  %v228 = vsub.s32 0, %v227
  %v229 = vrot.slane %v224, %v228
  %v233 = vunpack.c.l.b16 %v222
  %v234 = vunpack.c.l.b16 %v223
  %v235 = vpack.c.b16 %v234, %v233
  %vm237 = vcmask 130048
  %v239 = vsel %vm237, %v220, 0
  %v242 = vsel %vm237, %v221, 0
  %244 = vmatprep.subr.bf16.mxu0 0
  %245 = vmatpush1.bf16.msra.mxu0 %v235
  %246 = vmatprep.subr.bf16.mxu0 0
  %247 = vmatpush1.bf16.msra.mxu0 0
  %248 = vmatprep.subr.bf16.mxu0 0
  %249 = vmatpush1.bf16.msra.mxu0 0
  %250 = vmatprep.subr.bf16.mxu0 0
  %251 = vmatpush1.bf16.msra.mxu0 0
  %252 = vmatprep.subr.bf16.mxu0 0
  %253 = vmatpush1.bf16.msra.mxu0 0
  %254 = vmatprep.subr.bf16.mxu0 0
  %255 = vmatpush1.bf16.msra.mxu0 0
  %256 = vmatprep.subr.bf16.mxu0 0
  %257 = vmatpush1.bf16.msra.mxu0 0
  %258 = vmatprep.subr.bf16.mxu0 0
  %259 = vmatpush1.bf16.msra.mxu0 0
  %260 = vmatprep.subr.bf16.mxu0 0
  %261 = vmatpush1.bf16.msra.mxu0 0
  %262 = vmatprep.subr.bf16.mxu0 0
  %263 = vmatpush1.bf16.msra.mxu0 0
  %264 = vmatprep.subr.bf16.mxu0 0
  %265 = vmatpush1.bf16.msra.mxu0 0
  %266 = vmatprep.subr.bf16.mxu0 0
  %267 = vmatpush1.bf16.msra.mxu0 0
  %268 = vmatprep.subr.bf16.mxu0 0
  %269 = vmatpush1.bf16.msra.mxu0 0
  %270 = vmatprep.subr.bf16.mxu0 0
  %271 = vmatpush1.bf16.msra.mxu0 0
  %272 = vmatprep.subr.bf16.mxu0 0
  %273 = vmatpush1.bf16.msra.mxu0 0
  %274 = vmatprep.subr.bf16.mxu0 0
  %275 = vmatpush1.bf16.msra.mxu0 0
  %276 = vmatprep.mubr.bf16.mxu0 0
  %277 = vmatmul.mubr.bf16.gmra.mrb[0].mxu0 %v239
  %v278 = vpop.f32.mrb[0].mxu0
  %v279 = vadd.f32 %v229, %v278
  %v280 = vpop.f32.mrb[0].mxu0
  %v281 = vpop.f32.mrb[0].mxu0
  %v282 = vadd.f32 %v229, %v281
  %v283 = vpop.f32.mrb[0].mxu0
  %284 = vmatprep.mubr.bf16.mxu0 0
  %285 = vmatmul.mubr.bf16.gmra.mrb[0].mxu0 %v242
  %v286 = vpop.f32.mrb[0].mxu0
  %v287 = vadd.f32 %v229, %v286
  %v288 = vpop.f32.mrb[0].mxu0
  %v289 = vpop.f32.mrb[0].mxu0
  %v290 = vpop.f32.mrb[0].mxu0
  %291 = vdwg.mxu0
  %vm292 = vcmask 7168
  %293 = vst.msk [vmem:[%s7] sm:$0xff] %vm292, %v279
  %294 = vst.msk [vmem:[%s7 + $0x8] sm:$0xff] %vm292, %v282
  %295 = vst.msk [vmem:[%s7 + $0x10] sm:$0xff] %vm292, %v287
  // Predicated region
  $region30: #{tpu_custom_call.1} parent=0 // pred_check
    _
  $region31: #{tpu_custom_call.1} parent=0 // pred_check_branch
    %297 = sbr.rel (0) target = $region33
  $region32: #{tpu_custom_call.1} parent=0 // pred_region
    _
  $region33: #{tpu_custom_call.1} parent=0 // pred_fallthru
    _
  // Predicated region
  $region34: #{tpu_custom_call.1} parent=0 // pred_check
    _
  $region35: #{tpu_custom_call.1} parent=0 // pred_check_branch
    %299 = sbr.rel (0) target = $region37
  $region36: #{tpu_custom_call.1} parent=0 // pred_region
    _
  $region37: #{tpu_custom_call.1} parent=0 // pred_fallthru
    _

</llo_original>
